<compile_context>
chip_gen: v6e
topology: v6e:2x2x1
jax: 0.10.0
libtpu: 0.0.40
codegen_flags: <defaults>
</compile_context>

<pallas_src>
import functools

import numpy as np
import jax
import jax.numpy as jnp
from jax.experimental import pallas as pl
from jax.experimental.pallas import tpu as pltpu


def _inv_freq(channels):
    """inv_freq exactly as the PyTorch module computes it (float32)."""
    return (1.0 / (10000.0 ** (np.arange(0, channels, 2, dtype=np.float32)
                               / np.float32(channels)))).astype(np.float32)


def _pos_enc_kernel(inv_ref, lpos_ref, mask_ref, o_ref, *, tile_rows, fold):
    """Write one (tile_rows, fold*ch) tile of the folded encoding.

    Folded layout: folded row r, lane f  <->  original row r*fold + f//ch,
    column f % ch.  Per element:
        angle = row * inv_freq[col // 2]      (row is an exact integer; single
                                               f32 multiply == reference rounding)
        out   = cos(angle) if col odd else sin(angle)
    inv/lpos/mask are tiny (1, fold*ch) patterns resident in VMEM (constant
    block index); the folded-row index comes from an in-kernel sublane iota.
    """
    shape = o_ref.shape
    fold_row = pl.program_id(0) * tile_rows + jax.lax.broadcasted_iota(
        jnp.int32, shape, 0)
    # Exact integer global row (X < 2^24), converted to f32 exactly.
    row = (fold_row * fold).astype(jnp.float32) + lpos_ref[...]
    angle = row * inv_ref[...]
    s = jnp.sin(angle)
    c = jnp.cos(angle)
    # mask is 1.0 on cos (odd) columns, 0.0 on sin (even) columns.
    o_ref[...] = (s + mask_ref[...] * (c - s)).astype(o_ref.dtype)


def _choose_fold(X, ch):
    """Number of original rows folded into the lane dim (must divide X)."""
    if ch >= 128:
        return 1
    max_r = max(1, 1024 // ch)
    # Smallest divisor of X giving a 128-aligned folded row (unmasked stores).
    for r in range(1, max_r + 1):
        if X % r == 0 and (r * ch) % 128 == 0:
            return r
    # Otherwise the smallest divisor giving >= 128 lanes.
    for r in range(1, max_r + 1):
        if X % r == 0 and r * ch >= 128:
            return r
    # Tiny X: take the largest divisor (single short row is fine at this size).
    best = 1
    for r in range(1, min(X, max_r) + 1):
        if X % r == 0:
            best = r
    return best


def _choose_tile_rows(n_rows, width, itemsize, sublane, target_bytes=1 << 20):
    """Folded rows per output tile: sublane-aligned, ~1 MiB/buffer, >=2 tiles."""
    if n_rows <= sublane:
        return n_rows
    tb = max(sublane, (target_bytes // (width * itemsize)) // sublane * sublane)
    if tb >= n_rows:
        # Whole array fits in one tile; split roughly in half so the "parallel"
        # grid axis can use both TensorCores on v7x (harmless on v5e/v6e).
        half = -(-n_rows // 2)
        tb = -(-half // sublane) * sublane
        if tb >= n_rows:
            tb = max(sublane, (n_rows - 1) // sublane * sublane)
    return tb


def positional_encoding_1d(tensor, *, fold=None, block_rows=None):
    """JAX/Pallas equivalent of PositionalEncoding1D.forward.

    :param tensor: array of shape (batch, x, ch); only shape/dtype are used.
    :return: positional encoding of shape (batch, x, ch), dtype == tensor.dtype.
    """
    # TODO(synk): the module's `cached_penc` result-caching is host-side Python
    # state; this function is stateless — memoize in the caller if desired.
    if tensor.ndim != 3:
        raise RuntimeError("The input tensor has to be 3d!")
    B, X, orig_ch = tensor.shape
    assert X < 2 ** 24, "positions must be exactly representable in float32"
    channels = int(np.ceil(orig_ch / 2) * 2)
    dtype = tensor.dtype
    itemsize = np.dtype(dtype).itemsize
    sublane = {4: 8, 2: 16, 1: 32}.get(itemsize, 8)

    R = int(fold) if fold is not None else _choose_fold(X, orig_ch)
    if X % R != 0:
        raise ValueError("fold must divide x")
    n_rows = X // R           # folded rows (sublane axis of the output)
    width = R * orig_ch       # lanes per folded row

    TB = (int(block_rows) if block_rows is not None
          else _choose_tile_rows(n_rows, width, itemsize, sublane))
    assert TB == n_rows or TB % sublane == 0, "tile rows must be sublane-aligned"
    num_tiles = pl.cdiv(n_rows, TB)

    # Tiny per-column patterns (host-computed once, resident in VMEM).
    inv_freq = _inv_freq(channels)
    col = np.arange(orig_ch)
    inv_tiled = np.tile(inv_freq[col // 2], R)[None, :].astype(np.float32)
    mask_tiled = np.tile((col % 2).astype(np.float32), R)[None, :]
    lpos_tiled = np.repeat(np.arange(R, dtype=np.float32), orig_ch)[None, :]

    const_spec = pl.BlockSpec((1, width), lambda i: (0, 0))
    cost = pl.CostEstimate(
        # sin/cos lower to VPU polynomials (~15-20 flops each); no EUP transcendentals.
        flops=40 * X * orig_ch,
        transcendentals=0,
        bytes_accessed=X * orig_ch * itemsize + 3 * width * 4,
    )

    out_folded = pl.pallas_call(
        functools.partial(_pos_enc_kernel, tile_rows=TB, fold=R),
        out_shape=jax.ShapeDtypeStruct((n_rows, width), dtype),
        grid=(num_tiles,),
        in_specs=[const_spec, const_spec, const_spec],
        out_specs=pl.BlockSpec((TB, width), lambda i: (i, 0)),
        compiler_params=pltpu.CompilerParams(dimension_semantics=("parallel",)),
        cost_estimate=cost,
    )(jnp.asarray(inv_tiled), jnp.asarray(lpos_tiled), jnp.asarray(mask_tiled))

    # (X/R, R*ch) -> (X, ch) is a free row-major reshape; batch replication is
    # a pure broadcast since the encoding is batch-invariant.
    emb = out_folded.reshape(X, orig_ch)
    return jnp.broadcast_to(emb[None, :, :], (B, X, orig_ch))


def _reference_numpy(tensor):
    """Plain-NumPy reference mirroring the PyTorch module."""
    B, X, orig_ch = tensor.shape
    channels = int(np.ceil(orig_ch / 2) * 2)
    inv_freq = _inv_freq(channels)
    pos_x = np.arange(X, dtype=np.float32)
    sin_inp = np.einsum("i,j->ij", pos_x, inv_freq)
    emb = np.stack((np.sin(sin_inp), np.cos(sin_inp)), axis=-1).reshape(X, channels)
    emb = emb.astype(np.asarray(tensor).dtype)
    return np.broadcast_to(emb[None, :, :orig_ch], (B, X, orig_ch)).copy()


if __name__ == "__main__":
    key = jax.random.PRNGKey(0)
    configs = [
        dict(B=2, X=16, CH=32, tol=1e-5),                           # auto fold=4, single tile
        dict(B=2, X=64, CH=32, fold=4, block_rows=8, tol=1e-5),     # 2 tiles, tests row offsets
        dict(B=1, X=16, CH=7, tol=1e-5),                            # odd channel count
        dict(B=2, X=40, CH=32, fold=1, block_rows=16, tol=1e-5),    # partial last tile (16+16+8)
        dict(B=1, X=512, CH=64, tol=1e-4),                          # larger positions, auto tiling
    ]
    for cfg in configs:
        key, sub = jax.random.split(key)
        x_in = jax.random.normal(sub, (cfg["B"], cfg["X"], cfg["CH"]), dtype=jnp.float32)
        out = positional_encoding_1d(
            x_in, fold=cfg.get("fold"), block_rows=cfg.get("block_rows"))
        out = jax.block_until_ready(out)
        ref = _reference_numpy(np.asarray(x_in))
        np.testing.assert_allclose(np.asarray(out), ref, rtol=0.0, atol=cfg["tol"])

    print("KERNEL_OK")
</pallas_src>

<mosaic_0001>
module attributes {stable_mosaic.version = 11 : i64} {
  func.func @_pos_enc_kernel(%arg0: i32, %arg1: memref<1x128xf32, #tpu.memory_space<vmem>>, %arg2: memref<1x128xf32, #tpu.memory_space<vmem>>, %arg3: memref<1x128xf32, #tpu.memory_space<vmem>>, %arg4: memref<4x128xf32, #tpu.memory_space<vmem>>) attributes {dimension_semantics = [#tpu.dimension_semantics<parallel>], iteration_bounds = array<i64: 1>, scalar_prefetch = 0 : i64, scratch_operands = 0 : i64, tpu.core_type = #tpu.core_type<tc>, window_params = [{pipeline_mode = #tpu.pipeline_mode<synchronous>, transform_indices = @transform_0, window_bounds = array<i64: 1, 128>}, {pipeline_mode = #tpu.pipeline_mode<synchronous>, transform_indices = @transform_1, window_bounds = array<i64: 1, 128>}, {pipeline_mode = #tpu.pipeline_mode<synchronous>, transform_indices = @transform_2, window_bounds = array<i64: 1, 128>}, {transform_indices = @transform_3, window_bounds = array<i64: 4, 128>}]} {
    %c4_i32 = arith.constant 4 : i32
    %0 = arith.muli %arg0, %c4_i32 : i32
    %1 = tpu.iota {dimensions = array<i32: 0>} : vector<4x128xi32>
    %2 = vector.broadcast %0 : i32 to vector<4x128xi32>
    %3 = arith.addi %2, %1 : vector<4x128xi32>
    %c4_i32_0 = arith.constant 4 : i32
    %4 = vector.broadcast %c4_i32_0 : i32 to vector<4x128xi32>
    %5 = arith.muli %3, %4 : vector<4x128xi32>
    %6 = arith.sitofp %5 : vector<4x128xi32> to vector<4x128xf32>
    %c0 = arith.constant 0 : index
    %c0_1 = arith.constant 0 : index
    %7 = vector.load %arg2[%c0, %c0_1] : memref<1x128xf32, #tpu.memory_space<vmem>>, vector<1x128xf32>
    %8 = vector.broadcast %7 : vector<1x128xf32> to vector<4x128xf32>
    %9 = arith.addf %6, %8 : vector<4x128xf32>
    %c0_2 = arith.constant 0 : index
    %c0_3 = arith.constant 0 : index
    %10 = vector.load %arg1[%c0_2, %c0_3] : memref<1x128xf32, #tpu.memory_space<vmem>>, vector<1x128xf32>
    %11 = vector.broadcast %10 : vector<1x128xf32> to vector<4x128xf32>
    %12 = arith.mulf %9, %11 : vector<4x128xf32>
    %13 = math.sin %12 : vector<4x128xf32>
    %14 = math.cos %12 : vector<4x128xf32>
    %c0_4 = arith.constant 0 : index
    %c0_5 = arith.constant 0 : index
    %15 = vector.load %arg3[%c0_4, %c0_5] : memref<1x128xf32, #tpu.memory_space<vmem>>, vector<1x128xf32>
    %16 = arith.subf %14, %13 : vector<4x128xf32>
    %17 = vector.broadcast %15 : vector<1x128xf32> to vector<4x128xf32>
    %18 = arith.mulf %17, %16 : vector<4x128xf32>
    %19 = arith.addf %13, %18 : vector<4x128xf32>
    %c0_6 = arith.constant 0 : index
    %c0_7 = arith.constant 0 : index
    %20 = vector.load %arg4[%c0_6, %c0_7] : memref<4x128xf32, #tpu.memory_space<vmem>>, vector<4x128xf32>
    tpu.vector_store %arg4[%c0_6, %c0_7], %19 {strides = array<i32>} : memref<4x128xf32, #tpu.memory_space<vmem>>, vector<4x128xf32>,
    return
  }
  func.func @transform_0(%arg0: i32) -> (i32, i32) {
    %c0_i32 = arith.constant 0 : i32
    %c0_i32_0 = arith.constant 0 : i32
    %c0_i32_1 = arith.constant 0 : i32
    return %c0_i32, %c0_i32_0 : i32, i32
  }
  func.func @transform_1(%arg0: i32) -> (i32, i32) {
    %c0_i32 = arith.constant 0 : i32
    %c0_i32_0 = arith.constant 0 : i32
    %c0_i32_1 = arith.constant 0 : i32
    return %c0_i32, %c0_i32_0 : i32, i32
  }
  func.func @transform_2(%arg0: i32) -> (i32, i32) {
    %c0_i32 = arith.constant 0 : i32
    %c0_i32_0 = arith.constant 0 : i32
    %c0_i32_1 = arith.constant 0 : i32
    return %c0_i32, %c0_i32_0 : i32, i32
  }
  func.func @transform_3(%arg0: i32) -> (i32, i32) {
    %c0_i32 = arith.constant 0 : i32
    %c0_i32_0 = arith.constant 0 : i32
    return %arg0, %c0_i32 : i32, i32
  }
}

</mosaic_0001>

<llo_original>
// kernel: tpu_custom_call.1
$region0: #{tpu_custom_call.1}
  #allocation0 [shape = 'u32[]', space=smem, size = 0x4, offset = 0x4, fixed_abs, tag = 'smem constant byte address 0x4 - core index']
  #allocation1 [shape = 'u32[144,128]{1,0:T(1,128)}', space=vmem, size = 0x12000, scoped, tag = 'internal scratch']
  %s0 = inlined_call_operand.hbm [shape: f32[1,128], index: 0, kind: input, shape index: {}]
  %s1 = inlined_call_operand.vmem [shape: f32[1,128], index: 1, kind: input, shape index: {}]
  %s2 = inlined_call_operand.vmem [shape: f32[1,128], index: 2, kind: input, shape index: {}]
  %s3 = inlined_call_operand.hbm [shape: f32[4,128], index: 3, kind: output, shape index: {}]
  %s4 = sld [smem:[#allocation0]]
  $region26: #{tpu_custom_call.1} parent=0
    _
  %s6 = ssub.s32 1, %s4
  %s7 = scalar_select 0, %s6, %s4
  $region1: #{tpu_custom_call.1} parent=0
    #allocation2 [shape = 'u8[512]{0}', space=vmem, size = 0x400, scoped, tag = 'input window, operand 0, single buffered']
    #allocation3 [shape = 's32[1]{0}', space=sflag, size = 0x4, scoped, tag = 'scoped memory for tpu_custom_call.1']
    #allocation4 [shape = 's32[1]{0}', space=sflag, size = 0x4, scoped, tag = 'scoped memory for tpu_custom_call.1']
    #allocation5 [shape = 'u8[2048]{0}', space=vmem, size = 0x800, scoped, tag = 'output window, operand 0, single buffered']
    %8 = vsyncpa [#allocation3], 0
    %9 = vsyncpa [#allocation4], 0
    // Predicated region
    $region2: #{tpu_custom_call.1} parent=1 // pred_check
      _
    $region3: #{tpu_custom_call.1} parent=1 // pred_check_branch
      %11 = sbr.rel (0) target = $region5
    $region4: #{tpu_custom_call.1} parent=1 // pred_region
      %s13 = ssub.s32 16, 16
      %14 = vsyncadd [#allocation3], %s13
      %s16 = sshll.u32 [#allocation2], 4
      %s17 = int_to_ptr.vmem [resolvable:$true] %s16
      %19 = dma.hbm_to_vmem [thread:$0]  %s0, 16, %s17, [#allocation3]
    $region5: #{tpu_custom_call.1} parent=1 // pred_fallthru
      _
    // Predicated region
    $region6: #{tpu_custom_call.1} parent=1 // pred_check
      _
    $region7: #{tpu_custom_call.1} parent=1 // pred_check_branch
      %21 = sbr.rel (0) target = $region9
    $region8: #{tpu_custom_call.1} parent=1 // pred_region
      _
    $region9: #{tpu_custom_call.1} parent=1 // pred_fallthru
      _
    // Predicated region
    $region10: #{tpu_custom_call.1} parent=1 // pred_check
      _
    $region11: #{tpu_custom_call.1} parent=1 // pred_check_branch
      %23 = sbr.rel (0) target = $region13
    $region12: #{tpu_custom_call.1} parent=1 // pred_region
      _
    $region13: #{tpu_custom_call.1} parent=1 // pred_fallthru
      _
    // Predicated region
    $region14: #{tpu_custom_call.1} parent=1 // pred_check
      _
    $region15: #{tpu_custom_call.1} parent=1 // pred_check_branch
      %25 = sbr.rel (0) target = $region17
    $region16: #{tpu_custom_call.1} parent=1 // pred_region
      %26 = dma.done [#allocation3], 16
    $region17: #{tpu_custom_call.1} parent=1 // pred_fallthru
      _
    %s27 = smul.u32 0, 4
    %v28 = vlaneseq
    %v29 = vshrl.u32 %v28, 7
    %v30 = vstv %s27
    %v31 = vadd.s32 %v30, %v29
    %v32 = vmul.u32 %v31, 4
    %v33 = vcvt.s32.f32 %v32
    %v34 = vld [vmem:[%s1] sm:$0x1]
    %v36 = vlaneseq
    %v37 = vshrl.u32 %v36, 7
    %v38 = vsub.s32 0, %v37
    %v39 = vrot.slane %v34, %v38
    %v41 = vadd.f32 %v33, %v39
    %v42 = vld [vmem:[#allocation2] sm:$0x1]
    %v44 = vlaneseq
    %v45 = vshrl.u32 %v44, 7
    %v46 = vsub.s32 0, %v45
    %v47 = vrot.slane %v42, %v46
    %v49 = vmul.f32 %v41, %v47
    %v50 = vand.u32 2147483647, %v49
    %vm51 = vcmp.le.f32.partialorder %v50, 0.7853982
    %vm52 = vcmp.lt.s32.totalorder %v49, 0
    %v53 = vand.u32 %v49, 2139095040
    %v54 = vshrl.u32 %v53, 23
    %v55 = vsub.s32 %v54, 127
    %v56 = vand.u32 2147483647, %v49
    %v57 = vand.u32 %v56, 8388607
    %v58 = vor.u32 %v57, 8388608
    %v59 = vsub.s32 0, %v58
    %v60 = vadd.s32 %v55, 1
    %vm61 = vcmp.gt.s32.totalorder %v60, 0
    %v62 = vsel %vm61, %v60, 0
    %v63 = vshrl.u32 %v62, 5
    %v64 = vand.u32 %v62, 31
    %v65 = vsub.s32 32, %v64
    %v66 = vshrl.u32 683565275, %v65
    %v67 = vshll.u32 683565275, %v64
    %v68 = vshrl.u32 2475754826, %v65
    %v69 = vor.u32 %v67, %v68
    %v70 = vshll.u32 2475754826, %v64
    %v71 = vshrl.u32 2131351028, %v65
    %v72 = vor.u32 %v70, %v71
    %v73 = vshll.u32 2131351028, %v64
    %v74 = vshrl.u32 2102212464, %v65
    %v75 = vor.u32 %v73, %v74
    %v76 = vshll.u32 2102212464, %v64
    %v77 = vshrl.u32 920167782, %v65
    %v78 = vor.u32 %v76, %v77
    %v79 = vshll.u32 920167782, %v64
    %v80 = vshrl.u32 1326507024, %v65
    %v81 = vor.u32 %v79, %v80
    %vm82 = vcmp.lt.s32.totalorder %v63, 1
    %vm83 = vcmp.lt.s32.totalorder %v63, 2
    %vm84 = vcmp.lt.s32.totalorder %v63, 3
    %vm85 = vcmp.lt.s32.totalorder %v63, 4
    %v86 = vsel %vm82, %v66, %v69
    %v87 = vsel %vm85, %v75, 2102212464
    %v88 = vsel %vm84, %v72, %v87
    %v89 = vsel %vm83, %v86, %v88
    %v90 = vsel %vm82, %v69, %v72
    %v91 = vsel %vm85, %v78, 920167782
    %v92 = vsel %vm84, %v75, %v91
    %v93 = vsel %vm83, %v90, %v92
    %v94 = vsel %vm82, %v72, %v75
    %v95 = vsel %vm85, %v81, 1326507024
    %v96 = vsel %vm84, %v78, %v95
    %v97 = vsel %vm83, %v94, %v96
    %v98 = vshll.u32 %v58, 8
    %v99 = vmul.u32.u64.compose %v98, %v97
    %v100 = vextract.low.u32 %v99
    %v101 = vextract.high.u32 %v99
    %v102 = vmul.u32.u64.compose %v98, %v93
    %v103 = vextract.low.u32 %v102
    %v104 = vextract.high.u32 %v102
    %v105 = vmul.u32 %v98, %v89
    %v106 = vadd.s32 %v101, %v103
    %vm107 = vc.u32 %v101, %v103
    %v108 = vadd.s32 %v104, 1
    %v109 = vsel %vm107, %v108, %v104
    %v110 = vadd.s32 %v105, %v109
    %v111 = vadd.s32 %v110, 536870912
    %v112 = vshrl.u32 %v111, 30
    %v113 = vshll.u32 %v112, 30
    %v114 = vsub.s32 %v110, %v113
    %vm115 = vcmp.lt.s32.totalorder %v114, 0
    %v116 = vsub.s32 0, %v114
    %v117 = vsel %vm115, %v116, %v114
    %v118 = vclz %v117
    %v119 = vsub.s32 %v118, 2
    %vm120 = vcmp.gt.s32.totalorder 0, %v119
    %v121 = vsel %vm120, 0, %v119
    %v122 = vsub.s32 32, %v121
    %v123 = vshll.u32 %v114, %v121
    %v124 = vshrl.u32 %v106, %v122
    %v125 = vor.u32 %v123, %v124
    %v126 = vsub.s32 4294967266, %v121
    %v127 = vadd.s32 %v126, 127
    %v128 = vshll.u32 %v127, 23
    %v129 = vor.u32 4788187, %v128
    %v130 = vand.u32 2147483647, %v129
    %v132 = vcvt.s32.f32 %v125
    %v133 = vmul.f32 %v132, %v130
    %v134 = vxor.u32 %v133, 2147483648
    %v135 = vsel %vm52, %v134, %v133
    %v136 = vsub.s32 4, %v112
    %v137 = vsel %vm52, %v136, %v112
    %v138 = vsel %vm51, %v49, %v135
    %v139 = vsel %vm51, 0, %v137
    %v140 = vcosq.f32.pop %v138
    %v141 = vsinq.f32.pop %v138
    %vm142 = vweird.f32 %v49
    %v143 = vadd.s32 %v139, 3
    %v144 = vand.u32 %v143, 3
    %vm145 = vcmp.lt.s32.totalorder %v144, 2
    %vm146 = vcmp.eq.s32.totalorder %v144, 0
    %v147 = vxor.u32 %v141, 2147483648
    %v148 = vsel %vm146, %v140, %v147
    %vm149 = vcmp.eq.s32.totalorder %v144, 2
    %v150 = vxor.u32 %v140, 2147483648
    %v151 = vsel %vm149, %v150, %v141
    %v152 = vsel %vm145, %v148, %v151
    %v153 = vsel %vm142, nan, %v152
    %v154 = vand.u32 2147483647, %v49
    %vm155 = vcmp.le.f32.partialorder %v154, 0.7853982
    %vm156 = vcmp.lt.s32.totalorder %v49, 0
    %v157 = vand.u32 %v49, 2139095040
    %v158 = vshrl.u32 %v157, 23
    %v159 = vsub.s32 %v158, 127
    %v160 = vand.u32 2147483647, %v49
    %v161 = vand.u32 %v160, 8388607
    %v162 = vor.u32 %v161, 8388608
    %v163 = vsub.s32 0, %v162
    %v164 = vadd.s32 %v159, 1
    %vm165 = vcmp.gt.s32.totalorder %v164, 0
    %v166 = vsel %vm165, %v164, 0
    %v167 = vshrl.u32 %v166, 5
    %v168 = vand.u32 %v166, 31
    %v169 = vsub.s32 32, %v168
    %v170 = vshrl.u32 683565275, %v169
    %v171 = vshll.u32 683565275, %v168
    %v172 = vshrl.u32 2475754826, %v169
    %v173 = vor.u32 %v171, %v172
    %v174 = vshll.u32 2475754826, %v168
    %v175 = vshrl.u32 2131351028, %v169
    %v176 = vor.u32 %v174, %v175
    %v177 = vshll.u32 2131351028, %v168
    %v178 = vshrl.u32 2102212464, %v169
    %v179 = vor.u32 %v177, %v178
    %v180 = vshll.u32 2102212464, %v168
    %v181 = vshrl.u32 920167782, %v169
    %v182 = vor.u32 %v180, %v181
    %v183 = vshll.u32 920167782, %v168
    %v184 = vshrl.u32 1326507024, %v169
    %v185 = vor.u32 %v183, %v184
    %vm186 = vcmp.lt.s32.totalorder %v167, 1
    %vm187 = vcmp.lt.s32.totalorder %v167, 2
    %vm188 = vcmp.lt.s32.totalorder %v167, 3
    %vm189 = vcmp.lt.s32.totalorder %v167, 4
    %v190 = vsel %vm186, %v170, %v173
    %v191 = vsel %vm189, %v179, 2102212464
    %v192 = vsel %vm188, %v176, %v191
    %v193 = vsel %vm187, %v190, %v192
    %v194 = vsel %vm186, %v173, %v176
    %v195 = vsel %vm189, %v182, 920167782
    %v196 = vsel %vm188, %v179, %v195
    %v197 = vsel %vm187, %v194, %v196
    %v198 = vsel %vm186, %v176, %v179
    %v199 = vsel %vm189, %v185, 1326507024
    %v200 = vsel %vm188, %v182, %v199
    %v201 = vsel %vm187, %v198, %v200
    %v202 = vshll.u32 %v162, 8
    %v203 = vmul.u32.u64.compose %v202, %v201
    %v204 = vextract.low.u32 %v203
    %v205 = vextract.high.u32 %v203
    %v206 = vmul.u32.u64.compose %v202, %v197
    %v207 = vextract.low.u32 %v206
    %v208 = vextract.high.u32 %v206
    %v209 = vmul.u32 %v202, %v193
    %v210 = vadd.s32 %v205, %v207
    %vm211 = vc.u32 %v205, %v207
    %v212 = vadd.s32 %v208, 1
    %v213 = vsel %vm211, %v212, %v208
    %v214 = vadd.s32 %v209, %v213
    %v215 = vadd.s32 %v214, 536870912
    %v216 = vshrl.u32 %v215, 30
    %v217 = vshll.u32 %v216, 30
    %v218 = vsub.s32 %v214, %v217
    %vm219 = vcmp.lt.s32.totalorder %v218, 0
    %v220 = vsub.s32 0, %v218
    %v221 = vsel %vm219, %v220, %v218
    %v222 = vclz %v221
    %v223 = vsub.s32 %v222, 2
    %vm224 = vcmp.gt.s32.totalorder 0, %v223
    %v225 = vsel %vm224, 0, %v223
    %v226 = vsub.s32 32, %v225
    %v227 = vshll.u32 %v218, %v225
    %v228 = vshrl.u32 %v210, %v226
    %v229 = vor.u32 %v227, %v228
    %v230 = vsub.s32 4294967266, %v225
    %v231 = vadd.s32 %v230, 127
    %v232 = vshll.u32 %v231, 23
    %v233 = vor.u32 4788187, %v232
    %v234 = vand.u32 2147483647, %v233
    %v236 = vcvt.s32.f32 %v229
    %v237 = vmul.f32 %v236, %v234
    %v238 = vxor.u32 %v237, 2147483648
    %v239 = vsel %vm156, %v238, %v237
    %v240 = vsub.s32 4, %v216
    %v241 = vsel %vm156, %v240, %v216
    %v242 = vsel %vm155, %v49, %v239
    %v243 = vsel %vm155, 0, %v241
    %v244 = vcosq.f32.pop %v242
    %v245 = vsinq.f32.pop %v242
    %vm246 = vweird.f32 %v49
    %v247 = vand.u32 %v243, 3
    %vm248 = vcmp.lt.s32.totalorder %v247, 2
    %vm249 = vcmp.eq.s32.totalorder %v247, 0
    %v250 = vxor.u32 %v245, 2147483648
    %v251 = vsel %vm249, %v244, %v250
    %vm252 = vcmp.eq.s32.totalorder %v247, 2
    %v253 = vxor.u32 %v244, 2147483648
    %v254 = vsel %vm252, %v253, %v245
    %v255 = vsel %vm248, %v251, %v254
    %v256 = vsel %vm246, nan, %v255
    %v257 = vld [vmem:[%s2] sm:$0x1]
    %v258 = vsub.f32 %v256, %v153
    %v260 = vlaneseq
    %v261 = vshrl.u32 %v260, 7
    %v262 = vsub.s32 0, %v261
    %v263 = vrot.slane %v257, %v262
    %v265 = vmul.f32 %v263, %v258
    %v266 = vadd.f32 %v153, %v265
    %267 = vst [vmem:[#allocation5] sm:$0xf] %v266
    // Predicated region
    $region18: #{tpu_custom_call.1} parent=1 // pred_check
      _
    $region19: #{tpu_custom_call.1} parent=1 // pred_check_branch
      %269 = sbr.rel (0) target = $region21
    $region20: #{tpu_custom_call.1} parent=1 // pred_region
      %s271 = ssub.s32 64, 64
      %272 = vsyncadd [#allocation4], %s271
      %s274 = sshll.u32 [#allocation5], 4
      %s275 = int_to_ptr.vmem [resolvable:$true] %s274
      %277 = dma.vmem_to_hbm [thread:$0]  %s275, 64, %s3, [#allocation4]
    $region21: #{tpu_custom_call.1} parent=1 // pred_fallthru
      _
    // Predicated region
    $region22: #{tpu_custom_call.1} parent=1 // pred_check
      _
    $region23: #{tpu_custom_call.1} parent=1 // pred_check_branch
      %279 = sbr.rel (0) target = $region25
    $region24: #{tpu_custom_call.1} parent=1 // pred_region
      %280 = dma.done [#allocation4], 64
    $region25: #{tpu_custom_call.1} parent=1 // pred_fallthru
      _
    %281 = vsyncpa [#allocation3], 1
    %282 = vsyncpa [#allocation4], 1

</llo_original>
